<compile_context>
chip_gen: v5e
topology: v5e:2x2
jax: 0.10.0
libtpu: 0.0.40
codegen_flags: <defaults>
</compile_context>

<pallas_src>
import math

import jax
import jax.numpy as jnp
from jax import lax
from jax.experimental import pallas as pl
from jax.experimental.pallas import tpu as pltpu


NEG_INF = -1e30  # finite mask value: avoids exp(-inf - -inf) = NaN corner cases


# ----------------------------- tile sizing helpers -----------------------------

def _sublane_align(dtype):
    # 8 for 4-byte, 16 for 2-byte (bf16), 32 for 1-byte dtypes.
    return {4: 8, 2: 16, 1: 32}.get(jnp.dtype(dtype).itemsize, 8)


def _pick_tile(dim, target, align):
    """Largest `align`-multiple divisor of `dim` that is <= target, else full dim."""
    if dim <= target:
        return dim
    t = (target // align) * align
    while t >= align:
        if dim % t == 0:
            return t
        t -= align
    return dim


# ----------------------------- tiled matmul (projections) -----------------------------

def matmul_kernel(x_ref, w_ref, o_ref, acc_ref):
    # x: (tm, tk), w: (tk, tn) -> accumulate into f32 scratch, store on last k step.
    @pl.when(pl.program_id(2) == 0)
    def _init():
        acc_ref[...] = jnp.zeros_like(acc_ref)

    acc_ref[...] += jnp.dot(x_ref[...], w_ref[...], preferred_element_type=jnp.float32)

    @pl.when(pl.program_id(2) == pl.num_programs(2) - 1)
    def _store():
        o_ref[...] = acc_ref[...].astype(o_ref.dtype)


def matmul(x2d, wt, *, tm_target=512, tn_target=256, tk_target=512):
    """x2d: (M, K), wt: (K, N) already transposed. Returns x2d @ wt via a tiled Pallas kernel."""
    M, K = x2d.shape
    K2, N = wt.shape
    assert K == K2
    tm = _pick_tile(M, tm_target, _sublane_align(x2d.dtype))
    tn = _pick_tile(N, tn_target, 128)
    tk = _pick_tile(K, tk_target, 128)
    grid = (M // tm, N // tn, K // tk)
    return pl.pallas_call(
        matmul_kernel,
        out_shape=jax.ShapeDtypeStruct((M, N), x2d.dtype),
        grid_spec=pltpu.PrefetchScalarGridSpec(
            num_scalar_prefetch=0,
            grid=grid,
            in_specs=[
                pl.BlockSpec((tm, tk), lambda i, j, k: (i, k)),
                pl.BlockSpec((tk, tn), lambda i, j, k: (k, j)),
            ],
            out_specs=pl.BlockSpec((tm, tn), lambda i, j, k: (i, j)),
            scratch_shapes=[pltpu.VMEM((tm, tn), jnp.float32)],
        ),
        compiler_params=pltpu.CompilerParams(
            dimension_semantics=("parallel", "parallel", "arbitrary")
        ),
    )(x2d, wt)


# ----------------------------- flash attention (causal, GQA, fused RoPE) -----------------------------

def make_flash_kernel(n_rep, tq, tkv, hd):
    assert tq == tkv, "lower-triangular enumeration + diagonal-only mask assume tq == tkv"

    def kernel(qi_tbl, ki_tbl, q_ref, k_ref, v_ref, cq_ref, sq_ref, ck_ref, sk_ref,
               o_ref, m_sc, l_sc, acc_sc):
        # q_ref: (n_rep, tq, hd) -- the whole GQA group; k_ref/v_ref: (tkv, hd) (loaded once per group).
        s_idx = pl.program_id(2)
        qi = qi_tbl[s_idx]
        ki = ki_tbl[s_idx]

        @pl.when(ki == 0)  # first kv block of this q tile
        def _init():
            m_sc[...] = jnp.full(m_sc.shape, -jnp.inf, dtype=m_sc.dtype)
            l_sc[...] = jnp.zeros_like(l_sc)
            acc_sc[...] = jnp.zeros_like(acc_sc)

        dt = q_ref.dtype
        half = hd // 2
        cdims = (((1,), (1,)), ((), ()))

        def rope_halves(x, cos, sin):
            # half-split ("rotate-half") RoPE in f32; returns the two hd/2-wide halves so the scores
            # can be computed as two half-width MXU dots (no in-kernel concatenate needed).
            xf = x.astype(jnp.float32)
            x1 = xf[:, :half]
            x2 = xf[:, half:]
            return x1 * cos - x2 * sin, x1 * sin + x2 * cos

        def process(masked):
            cq = cq_ref[...]
            sq = sq_ref[...]
            k1, k2 = rope_halves(k_ref[...], ck_ref[...], sk_ref[...])
            k1 = k1.astype(dt)
            k2 = k2.astype(dt)
            v = v_ref[...]
            if masked:
                rows = lax.broadcasted_iota(jnp.int32, (tq, tkv), 0)
                cols = lax.broadcasted_iota(jnp.int32, (tq, tkv), 1)
                causal = cols <= rows  # diagonal block (qi == ki), so local indices suffice
            for r in range(n_rep):
                # cq/sq already carry the 1/sqrt(hd) scale (applied in f32).
                q1, q2 = rope_halves(q_ref[r], cq, sq)
                s = lax.dot_general(q1.astype(dt), k1, cdims,
                                    preferred_element_type=jnp.float32)
                s = s + lax.dot_general(q2.astype(dt), k2, cdims,
                                        preferred_element_type=jnp.float32)
                if masked:
                    s = jnp.where(causal, s, NEG_INF)
                m_prev = m_sc[r]
                m_new = jnp.maximum(m_prev, jnp.max(s, axis=-1, keepdims=True))
                alpha = jnp.exp(m_prev - m_new)
                p = jnp.exp(s - m_new)
                l_sc[r] = alpha * l_sc[r] + jnp.sum(p, axis=-1, keepdims=True)
                acc_sc[r] = alpha * acc_sc[r] + jnp.dot(
                    p.astype(v.dtype), v, preferred_element_type=jnp.float32)
                m_sc[r] = m_new

        @pl.when(ki != qi)  # interior block: strictly below the diagonal, no mask work at all
        def _interior():
            process(masked=False)

        @pl.when(ki == qi)  # diagonal block: mask, then finalize (it is the last step for this q tile)
        def _diag():
            process(masked=True)
            for r in range(n_rep):
                o_ref[r] = (acc_sc[r] * pl.reciprocal(l_sc[r], approx=True)).astype(o_ref.dtype)

    return kernel


def flash_attention(q, k, v, cos, sin, *, tile_target=512):
    """q: (bs, n_heads, S, hd); k, v: (bs, n_kv_heads, S, hd); cos/sin: (S, hd//2) f32.

    Causal flash SDPA with GQA head-grouping and in-kernel half-split RoPE on q/k.
    q/k are assumed to come from RoPE-row-permuted wq/wk (half-split layout)."""
    bs, nh, S, hd = q.shape
    nkv = k.shape[1]
    n_rep = nh // nkv
    scale = 1.0 / math.sqrt(hd)

    # tq == tkv; 128-aligned so the (tq, tkv) score tile is lane-dense (falls back to full S when small).
    t = _pick_tile(S, tile_target, 128)
    n_q = S // t

    # Enumerate only the lower-triangular (qi, ki) blocks; for each qi, ki runs 0..qi so the
    # diagonal block is the last (finalize) step of that q tile.
    qi_list, ki_list = [], []
    for qi in range(n_q):
        for ki in range(qi + 1):
            qi_list.append(qi)
            ki_list.append(ki)
    n_steps = len(qi_list)
    qi_tbl = jnp.asarray(qi_list, dtype=jnp.int32)
    ki_tbl = jnp.asarray(ki_list, dtype=jnp.int32)

    # q-side cos/sin carry the 1/sqrt(hd) scale (so q is scaled in f32 for free); k-side is unscaled.
    cq = (cos * scale).astype(jnp.float32)
    sq = (sin * scale).astype(jnp.float32)
    ck = cos.astype(jnp.float32)
    sk = sin.astype(jnp.float32)

    kernel = make_flash_kernel(n_rep, t, t, hd)

    def q_map(b, g, s, qi_t, ki_t):
        return (b, g, qi_t[s], 0)        # heads [g*n_rep, (g+1)*n_rep)

    def kv_map(b, g, s, qi_t, ki_t):
        return (b, g, ki_t[s], 0)        # kv head g, kv tile ki

    def cq_map(b, g, s, qi_t, ki_t):
        return (qi_t[s], 0)

    def ck_map(b, g, s, qi_t, ki_t):
        return (ki_t[s], 0)

    def o_map(b, g, s, qi_t, ki_t):
        return (b, g, qi_t[s], 0)        # constant across the ki sub-steps -> accumulator revisiting

    return pl.pallas_call(
        kernel,
        out_shape=jax.ShapeDtypeStruct((bs, nh, S, hd), q.dtype),
        grid_spec=pltpu.PrefetchScalarGridSpec(
            num_scalar_prefetch=2,
            grid=(bs, nkv, n_steps),
            in_specs=[
                pl.BlockSpec((None, n_rep, t, hd), q_map),
                pl.BlockSpec((None, None, t, hd), kv_map),
                pl.BlockSpec((None, None, t, hd), kv_map),
                pl.BlockSpec((t, hd // 2), cq_map),
                pl.BlockSpec((t, hd // 2), cq_map),
                pl.BlockSpec((t, hd // 2), ck_map),
                pl.BlockSpec((t, hd // 2), ck_map),
            ],
            out_specs=pl.BlockSpec((None, n_rep, t, hd), o_map),
            scratch_shapes=[
                pltpu.VMEM((n_rep, t, 1), jnp.float32),    # running max m (per group head)
                pltpu.VMEM((n_rep, t, 1), jnp.float32),    # running denom l
                pltpu.VMEM((n_rep, t, hd), jnp.float32),   # unnormalized output accumulator
            ],
        ),
        # bs * n_kv_heads should be even for v7x megacore balance; step axis carries the reduction.
        compiler_params=pltpu.CompilerParams(
            dimension_semantics=("parallel", "parallel", "arbitrary")
        ),
    )(qi_tbl, ki_tbl, q, k, v, cq, sq, ck, sk)


# ----------------------------- JAX glue (freqs, weight prep, wiring) -----------------------------

def precompute_freqs_cos_sin(per_head_dim, end, theta=10000.0):
    freqs = 1.0 / theta ** (
        jnp.arange(0, per_head_dim, 2)[: per_head_dim // 2].astype(jnp.float32)
        / per_head_dim
    )
    t = jnp.arange(end, dtype=jnp.float32)
    ang = jnp.outer(t, freqs)  # (end, per_head_dim // 2)
    return jnp.cos(ang), jnp.sin(ang)


def rope_permute_rows(w, hd):
    """Permute torch-style (out_features, in_features) rows so each head's output features go from
    interleaved complex pairs to half-split (rotate-half) order. q.k scores are invariant when the
    same permutation is applied to both wq and wk, so module semantics are preserved exactly."""
    out_f, in_f = w.shape
    nh = out_f // hd
    w4 = w.reshape(nh, hd // 2, 2, in_f)
    return jnp.concatenate([w4[:, :, 0, :], w4[:, :, 1, :]], axis=1).reshape(out_f, in_f)


def apply_rope_interleaved(x, cos, sin):
    # Reference-only: torch view_as_complex / view_as_real semantics (interleaved pairs).
    bs, S, H, hd = x.shape
    xr = x.astype(jnp.float32).reshape(bs, S, H, hd // 2, 2)
    x0, x1 = xr[..., 0], xr[..., 1]
    c = cos[None, :, None, :]
    s = sin[None, :, None, :]
    o0 = x0 * c - x1 * s
    o1 = x0 * s + x1 * c
    return jnp.stack([o0, o1], axis=-1).reshape(bs, S, H, hd).astype(x.dtype)


def attention_forward(x, params, n_heads, n_kv_heads, freqs_cos, freqs_sin):
    bs, S, dim = x.shape
    hd = dim // n_heads
    nq_feat = n_heads * hd
    nkv_feat = n_kv_heads * hd

    x2d = x.reshape(bs * S, dim)

    # Fused QKV projection: one tiled Pallas matmul over the concatenated (RoPE-permuted) weight.
    qkv = matmul(x2d, params["wqkv_t"])  # (bs*S, nq_feat + 2*nkv_feat)
    xq = qkv[:, :nq_feat].reshape(bs, S, n_heads, hd)
    xk = qkv[:, nq_feat:nq_feat + nkv_feat].reshape(bs, S, n_kv_heads, hd)
    xv = qkv[:, nq_feat + nkv_feat:].reshape(bs, S, n_kv_heads, hd)

    # Head-major layout keeps the (S, hd) minor dims legal for any hd (see TODO at top of file).
    q = xq.transpose(0, 2, 1, 3)  # (bs, n_heads, S, hd)
    k = xk.transpose(0, 2, 1, 3)  # (bs, n_kv_heads, S, hd)
    v = xv.transpose(0, 2, 1, 3)

    # RoPE (half-split) + scaling + causal softmax all happen inside the flash kernel.
    out = flash_attention(q, k, v, freqs_cos[:S], freqs_sin[:S])  # (bs, n_heads, S, hd)
    out = out.transpose(0, 2, 1, 3).reshape(bs * S, n_heads * hd)
    return matmul(out, params["wo_t"]).reshape(bs, S, dim)


def attention_reference(x, params, n_heads, n_kv_heads, freqs_cos, freqs_sin):
    """Pure-JAX reference (mirrors the PyTorch forward, un-permuted weights, interleaved RoPE)."""
    bs, S, dim = x.shape
    hd = dim // n_heads
    n_rep = n_heads // n_kv_heads
    with jax.default_matmul_precision("highest"):
        xq = (x @ params["wq"].T).reshape(bs, S, n_heads, hd)
        xk = (x @ params["wk"].T).reshape(bs, S, n_kv_heads, hd)
        xv = (x @ params["wv"].T).reshape(bs, S, n_kv_heads, hd)
        xq = apply_rope_interleaved(xq, freqs_cos[:S], freqs_sin[:S])
        xk = apply_rope_interleaved(xk, freqs_cos[:S], freqs_sin[:S])
        keys = jnp.repeat(xk, n_rep, axis=2)
        values = jnp.repeat(xv, n_rep, axis=2)
        q = xq.transpose(0, 2, 1, 3)
        k = keys.transpose(0, 2, 1, 3)
        v = values.transpose(0, 2, 1, 3)
        scores = jnp.einsum("bhqd,bhkd->bhqk", q, k) / math.sqrt(hd)
        mask = jnp.tril(jnp.ones((S, S), dtype=bool))
        scores = jnp.where(mask[None, None], scores, -jnp.inf)
        p = jax.nn.softmax(scores, axis=-1)
        out = jnp.einsum("bhqk,bhkd->bhqd", p, v)
        out = out.transpose(0, 2, 1, 3).reshape(bs, S, dim)
        return out @ params["wo"].T


# ----------------------------- main -----------------------------

def trunc_normal(key, shape, std):
    return std * jax.random.truncated_normal(key, -2.0, 2.0, shape, dtype=jnp.float32)


if __name__ == "__main__":
    # Module hyperparams (note: the torch module's `head_dim` ctor arg is the model dim).
    model_dim = 32          # "head_dim" ctor arg
    num_heads = 4
    num_kv_heads = 2
    max_seq_len = 16
    rope_theta = 10000.0
    per_head_dim = model_dim // num_heads  # 8

    bs, seqlen = 2, 8

    key = jax.random.PRNGKey(0)
    kx, kq, kk, kv, ko = jax.random.split(key, 5)

    x = jax.random.normal(kx, (bs, seqlen, model_dim), dtype=jnp.float32)

    # torch-style (out_features, in_features), trunc_normal std=0.02 (init_weights)
    wq = trunc_normal(kq, (num_heads * per_head_dim, model_dim), 0.02)
    wk = trunc_normal(kk, (num_kv_heads * per_head_dim, model_dim), 0.02)
    wv = trunc_normal(kv, (num_kv_heads * per_head_dim, model_dim), 0.02)
    wo = trunc_normal(ko, (model_dim, num_heads * per_head_dim), 0.02)

    # One-time weight prep: permute wq/wk rows to the half-split RoPE layout, fuse QKV, pre-transpose.
    wq_hs = rope_permute_rows(wq, per_head_dim)
    wk_hs = rope_permute_rows(wk, per_head_dim)
    params = {
        "wq": wq, "wk": wk, "wv": wv, "wo": wo,                               # reference (torch) weights
        "wqkv_t": jnp.transpose(jnp.concatenate([wq_hs, wk_hs, wv], axis=0)),  # (K, Nq+Nk+Nv)
        "wo_t": jnp.transpose(wo),                                            # (K, N)
    }

    freqs_cos, freqs_sin = precompute_freqs_cos_sin(per_head_dim, max_seq_len, rope_theta)

    out = attention_forward(x, params, num_heads, num_kv_heads, freqs_cos, freqs_sin)
    out = jax.block_until_ready(out)

    ref = attention_reference(x, params, num_heads, num_kv_heads, freqs_cos, freqs_sin)
    assert out.shape == (bs, seqlen, model_dim)
    assert jnp.allclose(out, ref, atol=1e-3, rtol=1e-2), "mismatch vs pure-JAX reference"

    print("KERNEL_OK")
</pallas_src>

<mosaic_0001>
module attributes {stable_mosaic.version = 11 : i64} {
  func.func @matmul_kernel(%arg0: i32, %arg1: i32, %arg2: i32, %arg3: memref<16x32xf32, #tpu.memory_space<vmem>>, %arg4: memref<32x64xf32, #tpu.memory_space<vmem>>, %arg5: memref<16x64xf32, #tpu.memory_space<vmem>>, %arg6: memref<16x64xf32, #tpu.memory_space<vmem>>) attributes {dimension_semantics = [#tpu.dimension_semantics<parallel>, #tpu.dimension_semantics<parallel>, #tpu.dimension_semantics<arbitrary>], iteration_bounds = array<i64: 1, 1, 1>, scalar_prefetch = 0 : i64, scratch_operands = 1 : i64, tpu.core_type = #tpu.core_type<tc>, window_params = [{transform_indices = @transform_0, window_bounds = array<i64: 16, 32>}, {transform_indices = @transform_1, window_bounds = array<i64: 32, 64>}, {transform_indices = @transform_2, window_bounds = array<i64: 16, 64>}]} {
    %c0_i32 = arith.constant 0 : i32
    %0 = arith.cmpi eq, %arg2, %c0_i32 : i32
    %1 = arith.extui %0 : i1 to i32
    %c0_i32_0 = arith.constant 0 : i32
    %2 = arith.cmpi ne, %1, %c0_i32_0 : i32
    scf.if %2 {
      %cst_10 = arith.constant 0.000000e+00 : f32
      %12 = vector.broadcast %cst_10 : f32 to vector<16x64xf32>
      %c0_11 = arith.constant 0 : index
      %c0_12 = arith.constant 0 : index
      %13 = vector.load %arg6[%c0_11, %c0_12] : memref<16x64xf32, #tpu.memory_space<vmem>>, vector<16x64xf32>
      tpu.vector_store %arg6[%c0_11, %c0_12], %12 {strides = array<i32>} : memref<16x64xf32, #tpu.memory_space<vmem>>, vector<16x64xf32>,
    } else {
    }
    %c0 = arith.constant 0 : index
    %c0_1 = arith.constant 0 : index
    %3 = vector.load %arg6[%c0, %c0_1] : memref<16x64xf32, #tpu.memory_space<vmem>>, vector<16x64xf32>
    %c0_2 = arith.constant 0 : index
    %c0_3 = arith.constant 0 : index
    %4 = vector.load %arg3[%c0_2, %c0_3] : memref<16x32xf32, #tpu.memory_space<vmem>>, vector<16x32xf32>
    %c0_4 = arith.constant 0 : index
    %c0_5 = arith.constant 0 : index
    %5 = vector.load %arg4[%c0_4, %c0_5] : memref<32x64xf32, #tpu.memory_space<vmem>>, vector<32x64xf32>
    %cst = arith.constant dense<0.000000e+00> : vector<16x64xf32>
    %6 = tpu.matmul %4, %5, %cst {dimension_numbers = #tpu.dot_dimension_numbers<[1], [0], [0], [1], [0, 0, 1, 1], [], []>} : vector<16x32xf32>, vector<32x64xf32>, vector<16x64xf32> -> vector<16x64xf32>
    %7 = arith.addf %3, %6 : vector<16x64xf32>
    %c0_6 = arith.constant 0 : index
    %c0_7 = arith.constant 0 : index
    %8 = vector.load %arg6[%c0_6, %c0_7] : memref<16x64xf32, #tpu.memory_space<vmem>>, vector<16x64xf32>
    tpu.vector_store %arg6[%c0_6, %c0_7], %7 {strides = array<i32>} : memref<16x64xf32, #tpu.memory_space<vmem>>, vector<16x64xf32>,
    %c0_i32_8 = arith.constant 0 : i32
    %9 = arith.cmpi eq, %arg2, %c0_i32_8 : i32
    %10 = arith.extui %9 : i1 to i32
    %c0_i32_9 = arith.constant 0 : i32
    %11 = arith.cmpi ne, %10, %c0_i32_9 : i32
    scf.if %11 {
      %c0_10 = arith.constant 0 : index
      %c0_11 = arith.constant 0 : index
      %12 = vector.load %arg6[%c0_10, %c0_11] : memref<16x64xf32, #tpu.memory_space<vmem>>, vector<16x64xf32>
      %c0_12 = arith.constant 0 : index
      %c0_13 = arith.constant 0 : index
      %13 = vector.load %arg5[%c0_12, %c0_13] : memref<16x64xf32, #tpu.memory_space<vmem>>, vector<16x64xf32>
      tpu.vector_store %arg5[%c0_12, %c0_13], %12 {strides = array<i32>} : memref<16x64xf32, #tpu.memory_space<vmem>>, vector<16x64xf32>,
    } else {
    }
    return
  }
  func.func @transform_0(%arg0: i32, %arg1: i32, %arg2: i32) -> (i32, i32) {
    %c0_i32 = arith.constant 0 : i32
    return %arg0, %arg2 : i32, i32
  }
  func.func @transform_1(%arg0: i32, %arg1: i32, %arg2: i32) -> (i32, i32) {
    %c0_i32 = arith.constant 0 : i32
    return %arg2, %arg1 : i32, i32
  }
  func.func @transform_2(%arg0: i32, %arg1: i32, %arg2: i32) -> (i32, i32) {
    %c0_i32 = arith.constant 0 : i32
    return %arg0, %arg1 : i32, i32
  }
}

</mosaic_0001>

<llo_original>
// kernel: tpu_custom_call.1
$region0: #{tpu_custom_call.1}
  #allocation0 [shape = 'u32[]', space=smem, size = 0x4, offset = 0x4, fixed_abs, tag = 'smem constant byte address 0x4 - core index']
  #allocation1 [shape = 'u32[72,128]{1,0:T(1,128)}', space=vmem, size = 0x9000, scoped, tag = 'internal scratch']
  #allocation2 [shape = 'f32[16,64]{1,0:T(8,128)}', space=vmem, size = 0x2000, scoped, tag = 'scratch operand']
  %s0 = inlined_call_operand.hbm [shape: f32[16,32], index: 0, kind: input, shape index: {}]
  %s1 = inlined_call_operand.hbm [shape: f32[32,64], index: 1, kind: input, shape index: {}]
  %s2 = inlined_call_operand.hbm [shape: f32[16,64], index: 2, kind: output, shape index: {}]
  %s3 = sld [smem:[#allocation0]]
  $region34: #{tpu_custom_call.1} parent=0
    _
  %s5 = ssub.s32 1, %s3
  %s6 = scalar_select 0, %s5, %s3
  $region1: #{tpu_custom_call.1} parent=0
    #allocation3 [shape = 'u8[8192]{0}', space=vmem, size = 0x2000, scoped, tag = 'input window, operand 0, single buffered']
    #allocation4 [shape = 's32[1]{0}', space=sflag, size = 0x4, scoped, tag = 'scoped memory for tpu_custom_call.1']
    #allocation5 [shape = 's32[1]{0}', space=sflag, size = 0x4, scoped, tag = 'scoped memory for tpu_custom_call.1']
    #allocation6 [shape = 'u8[16384]{0}', space=vmem, size = 0x4000, scoped, tag = 'input window, operand 1, single buffered']
    #allocation7 [shape = 's32[1]{0}', space=sflag, size = 0x4, scoped, tag = 'scoped memory for tpu_custom_call.1']
    #allocation8 [shape = 'u8[8192]{0}', space=vmem, size = 0x2000, scoped, tag = 'output window, operand 0, single buffered']
    %7 = vsyncpa [#allocation4], 0
    %8 = vsyncpa [#allocation7], 0
    %9 = vsyncpa [#allocation5], 0
    // Predicated region
    $region2: #{tpu_custom_call.1} parent=1 // pred_check
      _
    $region3: #{tpu_custom_call.1} parent=1 // pred_check_branch
      %11 = sbr.rel (0) target = $region5
    $region4: #{tpu_custom_call.1} parent=1 // pred_region
      %13 = vsyncadd [#allocation4], 0
      %s14 = sshll.u32 %s0, 4
      %s15 = int_to_ptr.hbm [resolvable:$true] %s14
      %s16 = sshll.u32 [#allocation3], 4
      %s17 = int_to_ptr.vmem [resolvable:$true] %s16
      %22 = dma.hbm_to_vmem [thread:$0]  %s15, 256, %s17, [#allocation4], 128, 128, 8
    $region5: #{tpu_custom_call.1} parent=1 // pred_fallthru
      _
    // Predicated region
    $region6: #{tpu_custom_call.1} parent=1 // pred_check
      _
    $region7: #{tpu_custom_call.1} parent=1 // pred_check_branch
      %24 = sbr.rel (0) target = $region9
    $region8: #{tpu_custom_call.1} parent=1 // pred_region
      %26 = vsyncadd [#allocation7], 0
      %s27 = sshll.u32 %s1, 4
      %s28 = int_to_ptr.hbm [resolvable:$true] %s27
      %s29 = sshll.u32 [#allocation6], 4
      %s30 = int_to_ptr.vmem [resolvable:$true] %s29
      %35 = dma.hbm_to_vmem [thread:$0]  %s28, 512, %s30, [#allocation7], 128, 128, 8
    $region9: #{tpu_custom_call.1} parent=1 // pred_fallthru
      _
    // Predicated region
    $region10: #{tpu_custom_call.1} parent=1 // pred_check
      _
    $region11: #{tpu_custom_call.1} parent=1 // pred_check_branch
      %37 = sbr.rel (0) target = $region13
    $region12: #{tpu_custom_call.1} parent=1 // pred_region
      %39 = dma.done [#allocation4], 256
    $region13: #{tpu_custom_call.1} parent=1 // pred_fallthru
      _
    // Predicated region
    $region14: #{tpu_custom_call.1} parent=1 // pred_check
      _
    $region15: #{tpu_custom_call.1} parent=1 // pred_check_branch
      %41 = sbr.rel (0) target = $region17
    $region16: #{tpu_custom_call.1} parent=1 // pred_region
      %43 = dma.done [#allocation7], 512
    $region17: #{tpu_custom_call.1} parent=1 // pred_fallthru
      _
    %p44 = scmp.eq.s32.totalorder 0, 0
    // Predicated region
    $region18: #{tpu_custom_call.1} parent=1 // pred_check
      %p45 = pneg %p44
    $region19: #{tpu_custom_call.1} parent=1 // pred_check_branch
      %47 = sbr.rel (%p45) target = $region21
    $region20: #{tpu_custom_call.1} parent=1 // pred_region
      %vm48 = vcmask 523264
      %49 = vst.msk [vmem:[#allocation2] sm:$0xff] %vm48, 0.0
      %50 = vst.msk [vmem:[#allocation2 + $0x8] sm:$0xff] %vm48, 0.0
    $region21: #{tpu_custom_call.1} parent=1 // pred_fallthru
      _
    %v51 = vld [vmem:[#allocation2] sm:$0xff]
    %v52 = vld [vmem:[#allocation2 + $0x8] sm:$0xff]
    %v53 = vld [vmem:[#allocation3] sm:$0xff]
    %v54 = vld [vmem:[#allocation3 + $0x8] sm:$0xff]
    %v55 = vld [vmem:[#allocation6] sm:$0xff]
    %v56 = vld [vmem:[#allocation6 + $0x8] sm:$0xff]
    %v57 = vld [vmem:[#allocation6 + $0x10] sm:$0xff]
    %v58 = vld [vmem:[#allocation6 + $0x18] sm:$0xff]
    %vm59 = vcmask 261120
    %v61 = vsel %vm59, %v53, 0
    %v64 = vsel %vm59, %v54, 0
    %66 = vmatpush.msra.mxu0 0.0
    %67 = vmatpush.msra.mxu0 0.0
    %68 = vmatpush.msra.mxu0 0.0
    %69 = vmatpush.msra.mxu0 0.0
    %70 = vmatpush.msra.mxu0 0.0
    %71 = vmatpush.msra.mxu0 0.0
    %72 = vmatpush.msra.mxu0 0.0
    %73 = vmatpush.msra.mxu0 0.0
    %74 = vmatpush.msra.mxu0 0.0
    %75 = vmatpush.msra.mxu0 0.0
    %76 = vmatpush.msra.mxu0 0.0
    %77 = vmatpush.msra.mxu0 0.0
    %78 = vmatpush.msra.mxu0 %v58
    %79 = vmatpush.msra.mxu0 %v57
    %80 = vmatpush.msra.mxu0 %v56
    %81 = vmatpush.msra.mxu0 %v55
    %82 = vmatmul.f32.gmra.mxu0 %v61
    %v83 = vpop.f32.mrf.mxu0
    %v84 = vadd.f32 0.0, %v83
    %85 = vmatmul.f32.gmra.mxu0 %v64
    %v86 = vpop.f32.mrf.mxu0
    %v87 = vadd.f32 0.0, %v86
    %88 = vdwg.mxu0
    %v89 = vadd.f32 %v51, %v84
    %v90 = vadd.f32 %v52, %v87
    %vm91 = vcmask 523264
    %92 = vst.msk [vmem:[#allocation2] sm:$0xff] %vm91, %v89
    %93 = vst.msk [vmem:[#allocation2 + $0x8] sm:$0xff] %vm91, %v90
    // Predicated region
    $region22: #{tpu_custom_call.1} parent=1 // pred_check
      %p94 = pneg %p44
    $region23: #{tpu_custom_call.1} parent=1 // pred_check_branch
      %96 = sbr.rel (%p94) target = $region25
    $region24: #{tpu_custom_call.1} parent=1 // pred_region
      %v97 = vld [vmem:[#allocation2] sm:$0xff]
      %v98 = vld [vmem:[#allocation2 + $0x8] sm:$0xff]
      %99 = vst.msk [vmem:[#allocation8] sm:$0xff] %vm91, %v97
      %100 = vst.msk [vmem:[#allocation8 + $0x8] sm:$0xff] %vm91, %v98
    $region25: #{tpu_custom_call.1} parent=1 // pred_fallthru
      _
    // Predicated region
    $region26: #{tpu_custom_call.1} parent=1 // pred_check
      _
    $region27: #{tpu_custom_call.1} parent=1 // pred_check_branch
      %102 = sbr.rel (0) target = $region29
    $region28: #{tpu_custom_call.1} parent=1 // pred_region
      %104 = vsyncadd [#allocation5], 0
      %s105 = sshll.u32 [#allocation8], 4
      %s106 = int_to_ptr.vmem [resolvable:$true] %s105
      %s107 = sshll.u32 %s2, 4
      %s108 = int_to_ptr.hbm [resolvable:$true] %s107
      %113 = dma.vmem_to_hbm [thread:$0]  %s106, 256, %s108, [#allocation5], 128, 128, 8
    $region29: #{tpu_custom_call.1} parent=1 // pred_fallthru
      _
    // Predicated region
    $region30: #{tpu_custom_call.1} parent=1 // pred_check
      _
    $region31: #{tpu_custom_call.1} parent=1 // pred_check_branch
      %115 = sbr.rel (0) target = $region33
    $region32: #{tpu_custom_call.1} parent=1 // pred_region
      %117 = dma.done [#allocation5], 256
    $region33: #{tpu_custom_call.1} parent=1 // pred_fallthru
      _
    %118 = vsyncpa [#allocation4], 1
    %119 = vsyncpa [#allocation7], 1
    %120 = vsyncpa [#allocation5], 1

</llo_original>
